<compile_context>
chip_gen: v5e
topology: v5e:2x2
jax: 0.10.0
libtpu: 0.0.40
codegen_flags: <defaults>
</compile_context>

<pallas_src>
import functools

import jax
import jax.numpy as jnp
from jax.experimental import pallas as pl
from jax.experimental.pallas import tpu as pltpu

_LANES = 128  # one full lane row; fused head is padded to this many columns


def _round_up8(n):
    return ((n + 7) // 8) * 8


def beta_actor_kernel(x_ref, w_ref, b_ref, out_ref):
    x = x_ref[...]          # (TILE_B, H)    features dtype
    w = w_ref[...]          # (H, 128)       features dtype, resident
    b = b_ref[...]          # (1, 128)       f32, resident

    # Single fused matmul for both heads (and padding columns); f32 accumulate.
    z = jnp.dot(x, w, preferred_element_type=jnp.float32) + b   # (TILE_B, 128) f32

    # Branch-free numerically-stable softplus: max(z,0) + log1p(exp(-|z|)).
    sp = jnp.maximum(z, 0.0) + jnp.log1p(jnp.exp(-jnp.abs(z)))

    # 1.0 + softplus(z) + 1e-6, constants folded.
    out_ref[...] = (sp + 1.000001).astype(out_ref.dtype)


@functools.partial(jax.jit, static_argnames=("tile_b",))
def beta_actor_forward(features, w_alpha, b_alpha, w_beta, b_beta, *, tile_b=None):
    """features: (B, H); w_*: (H, A); b_*: (A,). Returns (alpha, beta), each (B, A)."""
    B, H = features.shape
    A = w_alpha.shape[1]
    A2 = 2 * A
    assert A2 <= _LANES  # TODO(synk): tile the head dim if 2*action_dim > 128

    x_dtype = features.dtype
    x_bytes = jnp.dtype(x_dtype).itemsize

    # Fused, lane-dense head: (H, 128) weight and (1, 128) bias, zero padded.
    w_cat = jnp.concatenate([w_alpha, w_beta], axis=1).astype(x_dtype)     # (H, 2A)
    w_cat = jnp.pad(w_cat, ((0, 0), (0, _LANES - A2)))                     # (H, 128)
    b_cat = jnp.concatenate([b_alpha, b_beta], axis=0).astype(jnp.float32)  # (2A,)
    b_cat = jnp.pad(b_cat, (0, _LANES - A2)).reshape(1, _LANES)             # (1, 128)

    # --- TILE_B selection -------------------------------------------------
    B8 = _round_up8(B)

    # VMEM footprint per batch row: double-buffered feature tile + output tile.
    per_row = 2 * H * x_bytes + 2 * _LANES * 4
    # Resident weight/bias (conservatively count double-buffered too).
    resident = 2 * (H * _LANES * x_bytes + _LANES * 4)
    VMEM_BUDGET = 12 * 1024 * 1024  # safe under v5e's 16 MiB default scoped VMEM
    cap_rows = max(8, ((VMEM_BUDGET - resident) // per_row) // 8 * 8)

    if tile_b is not None:
        desired = _round_up8(tile_b)                 # explicit override (rounded to 8)
    elif B * H * x_bytes >= (1 << 20):
        desired = _round_up8(pl.cdiv(B8, 2))         # big enough: 2 tiles for v7x's 2 TCs
    else:
        desired = B8                                 # small: one grid step, no split
    TILE_B = max(8, min(desired, cap_rows, B8))

    grid = (pl.cdiv(B, TILE_B),)

    needed = resident + TILE_B * per_row
    vmem_limit = int(min(max(2 * needed, 4 * 1024 * 1024), 32 * 1024 * 1024))

    cost = pl.CostEstimate(
        flops=2 * B * H * _LANES,
        transcendentals=2 * B * _LANES,                     # exp + log1p per element
        bytes_accessed=x_bytes * (B * H + H * _LANES) + 4 * _LANES + x_bytes * B * _LANES,
    )

    out = pl.pallas_call(
        beta_actor_kernel,
        out_shape=jax.ShapeDtypeStruct((B, _LANES), x_dtype),
        grid_spec=pltpu.PrefetchScalarGridSpec(
            num_scalar_prefetch=0,
            grid=grid,
            in_specs=[
                pl.BlockSpec((TILE_B, H), lambda i: (i, 0)),       # feature tile (pipelined)
                pl.BlockSpec((H, _LANES), lambda i: (0, 0)),       # fused weight (resident)
                pl.BlockSpec((1, _LANES), lambda i: (0, 0)),       # fused bias   (resident)
            ],
            out_specs=pl.BlockSpec((TILE_B, _LANES), lambda i: (i, 0)),
        ),
        compiler_params=pltpu.CompilerParams(
            dimension_semantics=("parallel",),   # v7x: shard batch tiles across 2 TCs
            vmem_limit_bytes=vmem_limit,
        ),
        cost_estimate=cost,
    )(features, w_cat, b_cat)

    alpha = out[:, :A]
    beta = out[:, A:A2]
    return alpha, beta


if __name__ == "__main__":
    key = jax.random.PRNGKey(0)
    B, H, A = 8, 32, 4  # batch, feature dim (lazily inferred in torch), action_dim

    k_x, k_wa, k_ba, k_wb, k_bb = jax.random.split(key, 5)
    features = jax.random.normal(k_x, (B, H), dtype=jnp.float32)

    # Deterministic init mimicking nn.Linear's uniform(-1/sqrt(H), 1/sqrt(H)).
    bound = 1.0 / jnp.sqrt(jnp.float32(H))
    w_alpha = jax.random.uniform(k_wa, (H, A), jnp.float32, -bound, bound)
    b_alpha = jax.random.uniform(k_ba, (A,), jnp.float32, -bound, bound)
    w_beta = jax.random.uniform(k_wb, (H, A), jnp.float32, -bound, bound)
    b_beta = jax.random.uniform(k_bb, (A,), jnp.float32, -bound, bound)

    alpha, beta = beta_actor_forward(features, w_alpha, b_alpha, w_beta, b_beta)
    jax.block_until_ready((alpha, beta))

    # Reference check in plain JAX.
    ref_alpha = 1.0 + jax.nn.softplus(features @ w_alpha + b_alpha) + 1e-6
    ref_beta = 1.0 + jax.nn.softplus(features @ w_beta + b_beta) + 1e-6
    assert alpha.shape == (B, A) and beta.shape == (B, A)
    assert jnp.allclose(alpha, ref_alpha, atol=1e-5, rtol=1e-5)
    assert jnp.allclose(beta, ref_beta, atol=1e-5, rtol=1e-5)
    assert bool(jnp.all(alpha > 1.0)) and bool(jnp.all(beta > 1.0))

    # Also exercise a ragged batch with multiple grid steps (partial last block).
    B2 = 1037
    feats2 = jax.random.normal(jax.random.PRNGKey(1), (B2, H), dtype=jnp.float32)
    a2, b2 = beta_actor_forward(feats2, w_alpha, b_alpha, w_beta, b_beta, tile_b=256)
    jax.block_until_ready((a2, b2))
    ref_a2 = 1.0 + jax.nn.softplus(feats2 @ w_alpha + b_alpha) + 1e-6
    ref_b2 = 1.0 + jax.nn.softplus(feats2 @ w_beta + b_beta) + 1e-6
    assert a2.shape == (B2, A) and b2.shape == (B2, A)
    assert jnp.allclose(a2, ref_a2, atol=1e-5, rtol=1e-5)
    assert jnp.allclose(b2, ref_b2, atol=1e-5, rtol=1e-5)

    # And the auto-tiled (single grid step) path at a non-multiple-of-8 batch.
    B3 = 300
    feats3 = jax.random.normal(jax.random.PRNGKey(2), (B3, H), dtype=jnp.float32)
    a3, b3 = beta_actor_forward(feats3, w_alpha, b_alpha, w_beta, b_beta)
    jax.block_until_ready((a3, b3))
    ref_a3 = 1.0 + jax.nn.softplus(feats3 @ w_alpha + b_alpha) + 1e-6
    assert jnp.allclose(a3, ref_a3, atol=1e-5, rtol=1e-5)

    print("KERNEL_OK")
</pallas_src>

<mosaic_0001>
module attributes {stable_mosaic.version = 11 : i64} {
  func.func @beta_actor_kernel(%arg0: i32, %arg1: memref<8x32xf32, #tpu.memory_space<vmem>>, %arg2: memref<32x128xf32, #tpu.memory_space<vmem>>, %arg3: memref<1x128xf32, #tpu.memory_space<vmem>>, %arg4: memref<8x128xf32, #tpu.memory_space<vmem>>) attributes {dimension_semantics = [#tpu.dimension_semantics<parallel>], iteration_bounds = array<i64: 1>, scalar_prefetch = 0 : i64, scratch_operands = 0 : i64, tpu.core_type = #tpu.core_type<tc>, window_params = [{transform_indices = @transform_0, window_bounds = array<i64: 8, 32>}, {pipeline_mode = #tpu.pipeline_mode<synchronous>, transform_indices = @transform_1, window_bounds = array<i64: 32, 128>}, {pipeline_mode = #tpu.pipeline_mode<synchronous>, transform_indices = @transform_2, window_bounds = array<i64: 1, 128>}, {transform_indices = @transform_3, window_bounds = array<i64: 8, 128>}]} {
    %c0 = arith.constant 0 : index
    %c0_0 = arith.constant 0 : index
    %0 = vector.load %arg1[%c0, %c0_0] : memref<8x32xf32, #tpu.memory_space<vmem>>, vector<8x32xf32>
    %c0_1 = arith.constant 0 : index
    %c0_2 = arith.constant 0 : index
    %1 = vector.load %arg2[%c0_1, %c0_2] : memref<32x128xf32, #tpu.memory_space<vmem>>, vector<32x128xf32>
    %c0_3 = arith.constant 0 : index
    %c0_4 = arith.constant 0 : index
    %2 = vector.load %arg3[%c0_3, %c0_4] : memref<1x128xf32, #tpu.memory_space<vmem>>, vector<1x128xf32>
    %cst = arith.constant dense<0.000000e+00> : vector<8x128xf32>
    %3 = tpu.matmul %0, %1, %cst {dimension_numbers = #tpu.dot_dimension_numbers<[1], [0], [0], [1], [0, 0, 1, 1], [], []>} : vector<8x32xf32>, vector<32x128xf32>, vector<8x128xf32> -> vector<8x128xf32>
    %4 = vector.broadcast %2 : vector<1x128xf32> to vector<8x128xf32>
    %5 = arith.addf %3, %4 : vector<8x128xf32>
    %cst_5 = arith.constant 0.000000e+00 : f32
    %6 = vector.broadcast %cst_5 : f32 to vector<8x128xf32>
    %7 = arith.maximumf %5, %6 : vector<8x128xf32>
    %8 = math.absf %5 : vector<8x128xf32>
    %cst_6 = arith.constant 0.000000e+00 : f32
    %9 = vector.broadcast %cst_6 : f32 to vector<8x128xf32>
    %10 = arith.subf %9, %8 : vector<8x128xf32>
    %11 = math.exp %10 : vector<8x128xf32>
    %12 = math.log1p %11 : vector<8x128xf32>
    %13 = arith.addf %7, %12 : vector<8x128xf32>
    %cst_7 = arith.constant 1.00000095 : f32
    %14 = vector.broadcast %cst_7 : f32 to vector<8x128xf32>
    %15 = arith.addf %13, %14 : vector<8x128xf32>
    %c0_8 = arith.constant 0 : index
    %c0_9 = arith.constant 0 : index
    %16 = vector.load %arg4[%c0_8, %c0_9] : memref<8x128xf32, #tpu.memory_space<vmem>>, vector<8x128xf32>
    tpu.vector_store %arg4[%c0_8, %c0_9], %15 {strides = array<i32>} : memref<8x128xf32, #tpu.memory_space<vmem>>, vector<8x128xf32>,
    return
  }
  func.func @transform_0(%arg0: i32) -> (i32, i32) {
    %c0_i32 = arith.constant 0 : i32
    %c0_i32_0 = arith.constant 0 : i32
    return %arg0, %c0_i32 : i32, i32
  }
  func.func @transform_1(%arg0: i32) -> (i32, i32) {
    %c0_i32 = arith.constant 0 : i32
    %c0_i32_0 = arith.constant 0 : i32
    %c0_i32_1 = arith.constant 0 : i32
    return %c0_i32, %c0_i32_0 : i32, i32
  }
  func.func @transform_2(%arg0: i32) -> (i32, i32) {
    %c0_i32 = arith.constant 0 : i32
    %c0_i32_0 = arith.constant 0 : i32
    %c0_i32_1 = arith.constant 0 : i32
    return %c0_i32, %c0_i32_0 : i32, i32
  }
  func.func @transform_3(%arg0: i32) -> (i32, i32) {
    %c0_i32 = arith.constant 0 : i32
    %c0_i32_0 = arith.constant 0 : i32
    return %arg0, %c0_i32 : i32, i32
  }
}

</mosaic_0001>

<llo_original>
// kernel: beta_actor_forward.1
$region0: #{beta_actor_forward.1}
  #allocation0 [shape = 'u32[]', space=smem, size = 0x4, offset = 0x4, fixed_abs, tag = 'smem constant byte address 0x4 - core index']
  #allocation1 [shape = 'u32[72,128]{1,0:T(1,128)}', space=vmem, size = 0x9000, scoped, tag = 'internal scratch']
  %s0 = inlined_call_operand.vmem [shape: f32[8,32], index: 0, kind: input, shape index: {}]
  %s1 = inlined_call_operand.vmem [shape: f32[32,128], index: 1, kind: input, shape index: {}]
  %s2 = inlined_call_operand.vmem [shape: f32[1,128], index: 2, kind: input, shape index: {}]
  %s3 = inlined_call_operand.vmem [shape: f32[8,128], index: 3, kind: output, shape index: {}]
  %s4 = sld [smem:[#allocation0]]
  $region22: #{beta_actor_forward.1} parent=0
    _
  %s6 = ssub.s32 1, %s4
  %s7 = scalar_select 0, %s6, %s4
  // Predicated region
  $region2: #{beta_actor_forward.1} parent=0 // pred_check
    _
  $region3: #{beta_actor_forward.1} parent=0 // pred_check_branch
    %9 = sbr.rel (0) target = $region5
  $region4: #{beta_actor_forward.1} parent=0 // pred_region
    _
  $region5: #{beta_actor_forward.1} parent=0 // pred_fallthru
    _
  // Predicated region
  $region6: #{beta_actor_forward.1} parent=0 // pred_check
    _
  $region7: #{beta_actor_forward.1} parent=0 // pred_check_branch
    %11 = sbr.rel (0) target = $region9
  $region8: #{beta_actor_forward.1} parent=0 // pred_region
    _
  $region9: #{beta_actor_forward.1} parent=0 // pred_fallthru
    _
  // Predicated region
  $region10: #{beta_actor_forward.1} parent=0 // pred_check
    _
  $region11: #{beta_actor_forward.1} parent=0 // pred_check_branch
    %13 = sbr.rel (0) target = $region13
  $region12: #{beta_actor_forward.1} parent=0 // pred_region
    _
  $region13: #{beta_actor_forward.1} parent=0 // pred_fallthru
    _
  %v14 = vld [vmem:[%s0] sm:$0xff]
  %v15 = vld [vmem:[%s1] sm:$0xff]
  %v16 = vld [vmem:[%s1 + $0x8] sm:$0xff]
  %v17 = vld [vmem:[%s1 + $0x10] sm:$0xff]
  %v18 = vld [vmem:[%s1 + $0x18] sm:$0xff]
  %v19 = vld [vmem:[%s2] sm:$0x1]
  %v21 = vperm.slane %v19, 0
  %vm23 = vcmask 261120
  %v25 = vsel %vm23, %v14, 0
  %27 = vmatpush.msra.mxu0 0.0
  %28 = vmatpush.msra.mxu0 0.0
  %29 = vmatpush.msra.mxu0 0.0
  %30 = vmatpush.msra.mxu0 0.0
  %31 = vmatpush.msra.mxu0 0.0
  %32 = vmatpush.msra.mxu0 0.0
  %33 = vmatpush.msra.mxu0 0.0
  %34 = vmatpush.msra.mxu0 0.0
  %35 = vmatpush.msra.mxu0 0.0
  %36 = vmatpush.msra.mxu0 0.0
  %37 = vmatpush.msra.mxu0 0.0
  %38 = vmatpush.msra.mxu0 0.0
  %39 = vmatpush.msra.mxu0 %v18
  %40 = vmatpush.msra.mxu0 %v17
  %41 = vmatpush.msra.mxu0 %v16
  %42 = vmatpush.msra.mxu0 %v15
  %43 = vmatmul.f32.gmra.mxu0 %v25
  %v44 = vpop.f32.mrf.mxu0
  %v45 = vadd.f32 %v21, %v44
  %46 = vdwg.mxu0
  %v47 = vmax.f32 %v45, 0.0
  %v48 = vand.u32 2147483647, %v45
  %v49 = vsub.f32 0.0, %v48
  %v50 = vmul.f32 %v49, 1.442695
  %v51 = vpow.pop %v50
  %v52 = vadd.f32 %v51, 1.0
  %v53 = vlog2.pop %v52
  %v54 = vmul.f32 %v53, 0.6931472
  %v55 = vmul.f32 -0.5, %v51
  %v56 = vadd.f32 %v55, 1.0
  %v57 = vmul.f32 %v56, %v51
  %v58 = vand.u32 2147483647, %v51
  %vm59 = vcmp.lt.f32.partialorder %v58, 0.0004427343
  %v60 = vsel %vm59, %v57, %v54
  %v61 = vadd.f32 %v47, %v60
  %v62 = vadd.f32 %v61, 1.000001
  %63 = vst [vmem:[%s3] sm:$0xff] %v62
  // Predicated region
  $region14: #{beta_actor_forward.1} parent=0 // pred_check
    _
  $region15: #{beta_actor_forward.1} parent=0 // pred_check_branch
    %65 = sbr.rel (0) target = $region17
  $region16: #{beta_actor_forward.1} parent=0 // pred_region
    _
  $region17: #{beta_actor_forward.1} parent=0 // pred_fallthru
    _
  // Predicated region
  $region18: #{beta_actor_forward.1} parent=0 // pred_check
    _
  $region19: #{beta_actor_forward.1} parent=0 // pred_check_branch
    %67 = sbr.rel (0) target = $region21
  $region20: #{beta_actor_forward.1} parent=0 // pred_region
    _
  $region21: #{beta_actor_forward.1} parent=0 // pred_fallthru
    _

</llo_original>
